<compile_context>
chip_gen: v6e
topology: v6e:2x2x1
jax: 0.10.0
libtpu: 0.0.40
codegen_flags: <defaults>
</compile_context>

<pallas_src>
import functools

import jax
import jax.numpy as jnp
from jax.experimental import pallas as pl
from jax.experimental.pallas import tpu as pltpu


def concat_conv2d_kernel(x_ref, w_ref, o_ref, patch_ref, *, ksize, width,
                         channels):
    """Single invocation; lane axis = flattened (n, h, w) over the whole batch.

    x_ref:     (C, L)            L = N*H*W; NCHW-flat activations (no time ch).
    w_ref:     (Cout, K*K*C+1)   fused per-tap weights, last column = eff bias.
    o_ref:     (Cout, L)         o[co, n*H*W + ho*W + wo] is the valid-conv
                                 output at (n, co, ho, wo) for ho<Ho, wo<Wo;
                                 all other lanes are finite wrap values that
                                 the wrapper slices off.
    patch_ref: (K*K*C+1, L)      VMEM scratch: stacked shifted taps + ones row.
    """
    lanes = x_ref.shape[-1]
    x = x_ref[...]                                   # (C, L), loaded once

    # Stack the K*K shifted views of x along sublanes.  Shift by s = kh*W+kw
    # is a full-width lane rotation (roll left by s == roll right by L-s), so
    # every patch store is a full 512-lane dense store.
    for kh in range(ksize):
        for kw in range(ksize):
            s = kh * width + kw                      # static shift
            tap = kh * ksize + kw
            shifted = x if s == 0 else pltpu.roll(x, lanes - s, axis=1)
            patch_ref[pl.ds(tap * channels, channels), :] = shifted

    # Constant-ones contraction row: the effective bias rides the matmul, so
    # no separate accumulator init / VPU bias-add pass is needed.
    patch_ref[pl.ds(ksize * ksize * channels, 1), :] = jnp.ones(
        (1, lanes), patch_ref.dtype)

    # One fused MXU matmul instead of 9 tiny ones.
    o_ref[...] = jnp.dot(w_ref[...], patch_ref[...],
                         preferred_element_type=jnp.float32).astype(o_ref.dtype)


def concat_conv2d(t, x_nchw, w_oihw, bias, *, ksize=3):
    """Forward pass matching ConcatConv2d (stride=1, padding=0, dilation=1,
    groups=1, bias=True, transpose=False).  Returns NCHW like PyTorch."""
    N, C, H, W = x_nchw.shape
    Cout = w_oihw.shape[0]
    Ho, Wo = H - ksize + 1, W - ksize + 1
    L = N * H * W

    # Fold the constant time channel into an effective bias (exact for
    # padding=0 and scalar t): every output pixel gets t * sum_{kh,kw} w[:,0].
    # TODO(synk): if t is ever per-sample (shape (N,)), the bias must become
    # per-image (add it inside the kernel per lane-block) instead of folded.
    bias_eff = bias + t * jnp.sum(w_oihw[:, 0, :, :], axis=(-1, -2))     # (Cout,)

    # Activations: (N, C, H, W) -> (C, N*H*W).  Lane axis = flat (n, h, w);
    # 512 lanes = 4 fully dense f32 vregs per sublane row (tiny wrapper-side
    # layout plumbing, ~8 KiB).
    x_flat = jnp.transpose(x_nchw, (1, 0, 2, 3)).reshape(C, L)

    # Weights: (Cout, C+1, K, K) -> (Cout, K*K*C) ordered (kh, kw, c) to match
    # the patch-row order in the kernel; append the effective bias column.
    w_fused = jnp.transpose(w_oihw[:, 1:, :, :], (0, 2, 3, 1)).reshape(
        Cout, ksize * ksize * C)
    w_full = jnp.concatenate([w_fused, bias_eff[:, None]], axis=-1)

    kernel = functools.partial(concat_conv2d_kernel, ksize=ksize, width=W,
                               channels=C)

    out_flat = pl.pallas_call(
        kernel,
        out_shape=jax.ShapeDtypeStruct((Cout, L), x_nchw.dtype),
        in_specs=[
            pl.BlockSpec(memory_space=pltpu.MemorySpace.VMEM),
            pl.BlockSpec(memory_space=pltpu.MemorySpace.VMEM),
        ],
        out_specs=pl.BlockSpec(memory_space=pltpu.MemorySpace.VMEM),
        scratch_shapes=[pltpu.VMEM((ksize * ksize * C + 1, L), x_nchw.dtype)],
    )(x_flat, w_full)

    # out_flat[co, n*H*W + h*W + w] == out[n, co, h, w] for h<Ho, w<Wo; the
    # remaining columns are wrap values computed from in-range (finite) data
    # and are sliced off here.
    out = out_flat.reshape(Cout, N, H, W)
    out = jnp.transpose(out, (1, 0, 2, 3))[:, :, :Ho, :Wo]
    return out


def reference_concat_conv2d(t, x_nchw, w_oihw, bias):
    """Pure-JAX reference (lax conv, explicit time channel) for checking."""
    N, C, H, W = x_nchw.shape
    tt = jnp.ones((N, 1, H, W), x_nchw.dtype) * t
    ttx = jnp.concatenate([tt, x_nchw], axis=1)
    out = jax.lax.conv_general_dilated(
        ttx, w_oihw, window_strides=(1, 1), padding="VALID",
        dimension_numbers=("NCHW", "OIHW", "NCHW"))
    return out + bias.reshape(1, -1, 1, 1)


if __name__ == "__main__":
    # Module config: dim_in=4, dim_out=8, ksize=3, stride=1, padding=0.
    N, dim_in, dim_out, H, W, K = 2, 4, 8, 16, 16, 3

    key = jax.random.PRNGKey(0)
    kx, kt, kw, kb = jax.random.split(key, 4)

    x = jax.random.normal(kx, (N, dim_in, H, W), jnp.float32)
    t = jax.random.uniform(kt, (), jnp.float32)

    # Deterministic parameter init (PyTorch Conv2d default range).
    fan_in = (dim_in + 1) * K * K
    bound = 1.0 / jnp.sqrt(jnp.float32(fan_in))
    weight = jax.random.uniform(kw, (dim_out, dim_in + 1, K, K),
                                jnp.float32, -bound, bound)   # OIHW
    bias = jax.random.uniform(kb, (dim_out,), jnp.float32, -bound, bound)

    out = concat_conv2d(t, x, weight, bias, ksize=K)
    out = jax.block_until_ready(out)

    ref = reference_concat_conv2d(t, x, weight, bias)
    assert out.shape == (N, dim_out, H - K + 1, W - K + 1), out.shape
    assert jnp.allclose(out, ref, atol=1e-4, rtol=1e-4), \
        float(jnp.max(jnp.abs(out - ref)))

    print("KERNEL_OK")
</pallas_src>

<mosaic_0001>
module attributes {stable_mosaic.version = 11 : i64} {
  func.func @concat_conv2d_kernel(%arg0: memref<4x512xf32, #tpu.memory_space<vmem>>, %arg1: memref<8x37xf32, #tpu.memory_space<vmem>>, %arg2: memref<8x512xf32, #tpu.memory_space<vmem>>, %arg3: memref<37x512xf32, #tpu.memory_space<vmem>>) attributes {dimension_semantics = [], scalar_prefetch = 0 : i64, scratch_operands = 1 : i64, tpu.core_type = #tpu.core_type<tc>} {
    %c0 = arith.constant 0 : index
    %c0_0 = arith.constant 0 : index
    %0 = vector.load %arg0[%c0, %c0_0] : memref<4x512xf32, #tpu.memory_space<vmem>>, vector<4x512xf32>
    %c0_1 = arith.constant 0 : index
    %c0_2 = arith.constant 0 : index
    %1 = vector.load %arg3[%c0_1, %c0_2] : memref<37x512xf32, #tpu.memory_space<vmem>>, vector<4x512xf32>
    tpu.vector_store %arg3[%c0_1, %c0_2], %0 {strides = array<i32>} : memref<37x512xf32, #tpu.memory_space<vmem>>, vector<4x512xf32>,
    %c511_i32 = arith.constant 511 : i32
    %2 = tpu.dynamic_rotate %0 by %c511_i32 dim 1 : vector<4x512xf32>, i32 -> vector<4x512xf32>
    %c4 = arith.constant 4 : index
    %c0_3 = arith.constant 0 : index
    %3 = vector.load %arg3[%c4, %c0_3] : memref<37x512xf32, #tpu.memory_space<vmem>>, vector<4x512xf32>
    tpu.vector_store %arg3[%c4, %c0_3], %2 {strides = array<i32>} : memref<37x512xf32, #tpu.memory_space<vmem>>, vector<4x512xf32>,
    %c510_i32 = arith.constant 510 : i32
    %4 = tpu.dynamic_rotate %0 by %c510_i32 dim 1 : vector<4x512xf32>, i32 -> vector<4x512xf32>
    %c8 = arith.constant 8 : index
    %c0_4 = arith.constant 0 : index
    %5 = vector.load %arg3[%c8, %c0_4] : memref<37x512xf32, #tpu.memory_space<vmem>>, vector<4x512xf32>
    tpu.vector_store %arg3[%c8, %c0_4], %4 {strides = array<i32>} : memref<37x512xf32, #tpu.memory_space<vmem>>, vector<4x512xf32>,
    %c496_i32 = arith.constant 496 : i32
    %6 = tpu.dynamic_rotate %0 by %c496_i32 dim 1 : vector<4x512xf32>, i32 -> vector<4x512xf32>
    %c12 = arith.constant 12 : index
    %c0_5 = arith.constant 0 : index
    %7 = vector.load %arg3[%c12, %c0_5] : memref<37x512xf32, #tpu.memory_space<vmem>>, vector<4x512xf32>
    tpu.vector_store %arg3[%c12, %c0_5], %6 {strides = array<i32>} : memref<37x512xf32, #tpu.memory_space<vmem>>, vector<4x512xf32>,
    %c495_i32 = arith.constant 495 : i32
    %8 = tpu.dynamic_rotate %0 by %c495_i32 dim 1 : vector<4x512xf32>, i32 -> vector<4x512xf32>
    %c16 = arith.constant 16 : index
    %c0_6 = arith.constant 0 : index
    %9 = vector.load %arg3[%c16, %c0_6] : memref<37x512xf32, #tpu.memory_space<vmem>>, vector<4x512xf32>
    tpu.vector_store %arg3[%c16, %c0_6], %8 {strides = array<i32>} : memref<37x512xf32, #tpu.memory_space<vmem>>, vector<4x512xf32>,
    %c494_i32 = arith.constant 494 : i32
    %10 = tpu.dynamic_rotate %0 by %c494_i32 dim 1 : vector<4x512xf32>, i32 -> vector<4x512xf32>
    %c20 = arith.constant 20 : index
    %c0_7 = arith.constant 0 : index
    %11 = vector.load %arg3[%c20, %c0_7] : memref<37x512xf32, #tpu.memory_space<vmem>>, vector<4x512xf32>
    tpu.vector_store %arg3[%c20, %c0_7], %10 {strides = array<i32>} : memref<37x512xf32, #tpu.memory_space<vmem>>, vector<4x512xf32>,
    %c480_i32 = arith.constant 480 : i32
    %12 = tpu.dynamic_rotate %0 by %c480_i32 dim 1 : vector<4x512xf32>, i32 -> vector<4x512xf32>
    %c24 = arith.constant 24 : index
    %c0_8 = arith.constant 0 : index
    %13 = vector.load %arg3[%c24, %c0_8] : memref<37x512xf32, #tpu.memory_space<vmem>>, vector<4x512xf32>
    tpu.vector_store %arg3[%c24, %c0_8], %12 {strides = array<i32>} : memref<37x512xf32, #tpu.memory_space<vmem>>, vector<4x512xf32>,
    %c479_i32 = arith.constant 479 : i32
    %14 = tpu.dynamic_rotate %0 by %c479_i32 dim 1 : vector<4x512xf32>, i32 -> vector<4x512xf32>
    %c28 = arith.constant 28 : index
    %c0_9 = arith.constant 0 : index
    %15 = vector.load %arg3[%c28, %c0_9] : memref<37x512xf32, #tpu.memory_space<vmem>>, vector<4x512xf32>
    tpu.vector_store %arg3[%c28, %c0_9], %14 {strides = array<i32>} : memref<37x512xf32, #tpu.memory_space<vmem>>, vector<4x512xf32>,
    %c478_i32 = arith.constant 478 : i32
    %16 = tpu.dynamic_rotate %0 by %c478_i32 dim 1 : vector<4x512xf32>, i32 -> vector<4x512xf32>
    %c32 = arith.constant 32 : index
    %c0_10 = arith.constant 0 : index
    %17 = vector.load %arg3[%c32, %c0_10] : memref<37x512xf32, #tpu.memory_space<vmem>>, vector<4x512xf32>
    tpu.vector_store %arg3[%c32, %c0_10], %16 {strides = array<i32>} : memref<37x512xf32, #tpu.memory_space<vmem>>, vector<4x512xf32>,
    %cst = arith.constant 1.000000e+00 : f32
    %18 = vector.broadcast %cst : f32 to vector<1x512xf32>
    %c36 = arith.constant 36 : index
    %c0_11 = arith.constant 0 : index
    %19 = vector.load %arg3[%c36, %c0_11] : memref<37x512xf32, #tpu.memory_space<vmem>>, vector<1x512xf32>
    tpu.vector_store %arg3[%c36, %c0_11], %18 {strides = array<i32>} : memref<37x512xf32, #tpu.memory_space<vmem>>, vector<1x512xf32>,
    %c0_12 = arith.constant 0 : index
    %c0_13 = arith.constant 0 : index
    %20 = vector.load %arg1[%c0_12, %c0_13] : memref<8x37xf32, #tpu.memory_space<vmem>>, vector<8x37xf32>
    %c0_14 = arith.constant 0 : index
    %c0_15 = arith.constant 0 : index
    %21 = vector.load %arg3[%c0_14, %c0_15] : memref<37x512xf32, #tpu.memory_space<vmem>>, vector<37x512xf32>
    %cst_16 = arith.constant dense<0.000000e+00> : vector<8x512xf32>
    %22 = tpu.matmul %20, %21, %cst_16 {dimension_numbers = #tpu.dot_dimension_numbers<[1], [0], [0], [1], [0, 0, 1, 1], [], []>} : vector<8x37xf32>, vector<37x512xf32>, vector<8x512xf32> -> vector<8x512xf32>
    %c0_17 = arith.constant 0 : index
    %c0_18 = arith.constant 0 : index
    %23 = vector.load %arg2[%c0_17, %c0_18] : memref<8x512xf32, #tpu.memory_space<vmem>>, vector<8x512xf32>
    tpu.vector_store %arg2[%c0_17, %c0_18], %22 {strides = array<i32>} : memref<8x512xf32, #tpu.memory_space<vmem>>, vector<8x512xf32>,
    return
  }
}

</mosaic_0001>

<llo_original>
// kernel: tpu_custom_call.1
$region0: #{tpu_custom_call.1}
  #allocation0 [shape = 'u32[]', space=smem, size = 0x4, offset = 0x4, fixed_abs, tag = 'smem constant byte address 0x4 - core index']
  #allocation1 [shape = 'u32[144,128]{1,0:T(1,128)}', space=vmem, size = 0x12000, scoped, tag = 'internal scratch']
  #allocation2 [shape = 'f32[37,512]{1,0:T(8,128)}', space=vmem, size = 0x14000, scoped, tag = 'scratch operand']
  %s0 = inlined_call_operand.hbm [shape: f32[4,512], index: 0, kind: input, shape index: {}]
  %s1 = inlined_call_operand.hbm [shape: f32[8,37], index: 1, kind: input, shape index: {}]
  %s2 = inlined_call_operand.hbm [shape: f32[8,512], index: 2, kind: output, shape index: {}]
  %s3 = sld [smem:[#allocation0]]
  $region26: #{tpu_custom_call.1} parent=0
    _
  %s5 = ssub.s32 1, %s3
  %s6 = scalar_select 0, %s5, %s3
  $region1: #{tpu_custom_call.1} parent=0
    #allocation3 [shape = 'u8[8192]{0}', space=vmem, size = 0x2000, scoped, tag = 'input window, operand 0, single buffered']
    #allocation4 [shape = 's32[1]{0}', space=sflag, size = 0x4, scoped, tag = 'scoped memory for tpu_custom_call.1']
    #allocation5 [shape = 's32[1]{0}', space=sflag, size = 0x4, scoped, tag = 'scoped memory for tpu_custom_call.1']
    #allocation6 [shape = 'u8[4096]{0}', space=vmem, size = 0x1000, scoped, tag = 'input window, operand 1, single buffered']
    #allocation7 [shape = 's32[1]{0}', space=sflag, size = 0x4, scoped, tag = 'scoped memory for tpu_custom_call.1']
    #allocation8 [shape = 'u8[16384]{0}', space=vmem, size = 0x4000, scoped, tag = 'output window, operand 0, single buffered']
    %7 = vsyncpa [#allocation4], 0
    %8 = vsyncpa [#allocation7], 0
    %9 = vsyncpa [#allocation5], 0
    // Predicated region
    $region2: #{tpu_custom_call.1} parent=1 // pred_check
      _
    $region3: #{tpu_custom_call.1} parent=1 // pred_check_branch
      %11 = sbr.rel (0) target = $region5
    $region4: #{tpu_custom_call.1} parent=1 // pred_region
      %s13 = ssub.s32 256, 256
      %14 = vsyncadd [#allocation4], %s13
      %s16 = sshll.u32 [#allocation3], 4
      %s17 = int_to_ptr.vmem [resolvable:$true] %s16
      %19 = dma.hbm_to_vmem [thread:$0]  %s0, 256, %s17, [#allocation4]
    $region5: #{tpu_custom_call.1} parent=1 // pred_fallthru
      _
    // Predicated region
    $region6: #{tpu_custom_call.1} parent=1 // pred_check
      _
    $region7: #{tpu_custom_call.1} parent=1 // pred_check_branch
      %21 = sbr.rel (0) target = $region9
    $region8: #{tpu_custom_call.1} parent=1 // pred_region
      %s23 = ssub.s32 128, 128
      %24 = vsyncadd [#allocation7], %s23
      %s26 = sshll.u32 [#allocation6], 4
      %s27 = int_to_ptr.vmem [resolvable:$true] %s26
      %29 = dma.hbm_to_vmem [thread:$0]  %s1, 128, %s27, [#allocation7]
    $region9: #{tpu_custom_call.1} parent=1 // pred_fallthru
      _
    // Predicated region
    $region10: #{tpu_custom_call.1} parent=1 // pred_check
      _
    $region11: #{tpu_custom_call.1} parent=1 // pred_check_branch
      %31 = sbr.rel (0) target = $region13
    $region12: #{tpu_custom_call.1} parent=1 // pred_region
      %32 = dma.done [#allocation4], 256
    $region13: #{tpu_custom_call.1} parent=1 // pred_fallthru
      _
    // Predicated region
    $region14: #{tpu_custom_call.1} parent=1 // pred_check
      _
    $region15: #{tpu_custom_call.1} parent=1 // pred_check_branch
      %34 = sbr.rel (0) target = $region17
    $region16: #{tpu_custom_call.1} parent=1 // pred_region
      %35 = dma.done [#allocation7], 128
    $region17: #{tpu_custom_call.1} parent=1 // pred_fallthru
      _
    %v36 = vld [vmem:[#allocation3] sm:$0xff]
    %v37 = vld [vmem:[#allocation3 + $0x8] sm:$0xff]
    %v40 = vcombine.high %v36, %v36
    %v41 = vcombine.high %v37, %v37
    %44 = vst [vmem:[#allocation2] sm:$0xf] %v36
    %45 = vst [vmem:[#allocation2 + $0x8] sm:$0xf] %v40
    %46 = vst [vmem:[#allocation2 + $0x10] sm:$0xf] %v37
    %47 = vst [vmem:[#allocation2 + $0x18] sm:$0xf] %v41
    %48 = vrot.lane.b32.xlu0 %v36, 127
    %v49 = vpop.permute.xlu0 %48
    %50 = vrot.lane.b32.xlu0 %v40, 127
    %v51 = vpop.permute.xlu0 %50
    %52 = vrot.lane.b32.xlu0 %v37, 127
    %v53 = vpop.permute.xlu0 %52
    %54 = vrot.lane.b32.xlu0 %v41, 127
    %v55 = vpop.permute.xlu0 %54
    %v56 = vlaneseq
    %v57 = vand.u32 %v56, 127
    %vm58 = vcmp.lt.s32.totalorder %v57, 127
    %v59 = vsel %vm58, %v53, %v55
    %v60 = vsel %vm58, %v51, %v53
    %v61 = vsel %vm58, %v49, %v51
    %v62 = vsel %vm58, %v55, %v49
    %v67 = vrot.slane %v61, 4
    %v68 = vrot.slane %v60, 4
    %v69 = vrot.slane %v59, 4
    %v70 = vrot.slane %v62, 4
    %75 = vst [vmem:[#allocation2] sm:$0xf0] %v67
    %76 = vst [vmem:[#allocation2 + $0x8] sm:$0xf0] %v68
    %77 = vst [vmem:[#allocation2 + $0x10] sm:$0xf0] %v69
    %78 = vst [vmem:[#allocation2 + $0x18] sm:$0xf0] %v70
    %79 = vrot.lane.b32.xlu0 %v36, 126
    %v80 = vpop.permute.xlu0 %79
    %81 = vrot.lane.b32.xlu0 %v40, 126
    %v82 = vpop.permute.xlu0 %81
    %83 = vrot.lane.b32.xlu0 %v37, 126
    %v84 = vpop.permute.xlu0 %83
    %85 = vrot.lane.b32.xlu0 %v41, 126
    %v86 = vpop.permute.xlu0 %85
    %vm87 = vcmp.lt.s32.totalorder %v57, 126
    %v88 = vsel %vm87, %v84, %v86
    %v89 = vsel %vm87, %v82, %v84
    %v90 = vsel %vm87, %v80, %v82
    %v91 = vsel %vm87, %v86, %v80
    %92 = vst [vmem:[#allocation2 + $0x20] sm:$0xf] %v90
    %93 = vst [vmem:[#allocation2 + $0x28] sm:$0xf] %v89
    %94 = vst [vmem:[#allocation2 + $0x30] sm:$0xf] %v88
    %95 = vst [vmem:[#allocation2 + $0x38] sm:$0xf] %v91
    %96 = vrot.lane.b32.xlu0 %v36, 112
    %v97 = vpop.permute.xlu0 %96
    %98 = vrot.lane.b32.xlu0 %v40, 112
    %v99 = vpop.permute.xlu0 %98
    %100 = vrot.lane.b32.xlu0 %v37, 112
    %v101 = vpop.permute.xlu0 %100
    %102 = vrot.lane.b32.xlu0 %v41, 112
    %v103 = vpop.permute.xlu0 %102
    %vm104 = vcmp.lt.s32.totalorder %v57, 112
    %v105 = vsel %vm104, %v101, %v103
    %v106 = vsel %vm104, %v99, %v101
    %v107 = vsel %vm104, %v97, %v99
    %v108 = vsel %vm104, %v103, %v97
    %v113 = vrot.slane %v107, 4
    %v114 = vrot.slane %v106, 4
    %v115 = vrot.slane %v105, 4
    %v116 = vrot.slane %v108, 4
    %121 = vst [vmem:[#allocation2 + $0x20] sm:$0xf0] %v113
    %122 = vst [vmem:[#allocation2 + $0x28] sm:$0xf0] %v114
    %123 = vst [vmem:[#allocation2 + $0x30] sm:$0xf0] %v115
    %124 = vst [vmem:[#allocation2 + $0x38] sm:$0xf0] %v116
    %125 = vrot.lane.b32.xlu0 %v36, 111
    %v126 = vpop.permute.xlu0 %125
    %127 = vrot.lane.b32.xlu0 %v40, 111
    %v128 = vpop.permute.xlu0 %127
    %129 = vrot.lane.b32.xlu0 %v37, 111
    %v130 = vpop.permute.xlu0 %129
    %131 = vrot.lane.b32.xlu0 %v41, 111
    %v132 = vpop.permute.xlu0 %131
    %vm133 = vcmp.lt.s32.totalorder %v57, 111
    %v134 = vsel %vm133, %v130, %v132
    %v135 = vsel %vm133, %v128, %v130
    %v136 = vsel %vm133, %v126, %v128
    %v137 = vsel %vm133, %v132, %v126
    %138 = vst [vmem:[#allocation2 + $0x40] sm:$0xf] %v136
    %139 = vst [vmem:[#allocation2 + $0x48] sm:$0xf] %v135
    %140 = vst [vmem:[#allocation2 + $0x50] sm:$0xf] %v134
    %141 = vst [vmem:[#allocation2 + $0x58] sm:$0xf] %v137
    %142 = vrot.lane.b32.xlu0 %v36, 110
    %v143 = vpop.permute.xlu0 %142
    %144 = vrot.lane.b32.xlu0 %v40, 110
    %v145 = vpop.permute.xlu0 %144
    %146 = vrot.lane.b32.xlu0 %v37, 110
    %v147 = vpop.permute.xlu0 %146
    %148 = vrot.lane.b32.xlu0 %v41, 110
    %v149 = vpop.permute.xlu0 %148
    %vm150 = vcmp.lt.s32.totalorder %v57, 110
    %v151 = vsel %vm150, %v147, %v149
    %v152 = vsel %vm150, %v145, %v147
    %v153 = vsel %vm150, %v143, %v145
    %v154 = vsel %vm150, %v149, %v143
    %v159 = vrot.slane %v153, 4
    %v160 = vrot.slane %v152, 4
    %v161 = vrot.slane %v151, 4
    %v162 = vrot.slane %v154, 4
    %167 = vst [vmem:[#allocation2 + $0x40] sm:$0xf0] %v159
    %168 = vst [vmem:[#allocation2 + $0x48] sm:$0xf0] %v160
    %169 = vst [vmem:[#allocation2 + $0x50] sm:$0xf0] %v161
    %170 = vst [vmem:[#allocation2 + $0x58] sm:$0xf0] %v162
    %171 = vrot.lane.b32.xlu0 %v36, 96
    %v172 = vpop.permute.xlu0 %171
    %173 = vrot.lane.b32.xlu0 %v40, 96
    %v174 = vpop.permute.xlu0 %173
    %175 = vrot.lane.b32.xlu0 %v37, 96
    %v176 = vpop.permute.xlu0 %175
    %177 = vrot.lane.b32.xlu0 %v41, 96
    %v178 = vpop.permute.xlu0 %177
    %vm179 = vcmp.lt.s32.totalorder %v57, 96
    %v180 = vsel %vm179, %v176, %v178
    %v181 = vsel %vm179, %v174, %v176
    %v182 = vsel %vm179, %v172, %v174
    %v183 = vsel %vm179, %v178, %v172
    %184 = vst [vmem:[#allocation2 + $0x60] sm:$0xf] %v182
    %185 = vst [vmem:[#allocation2 + $0x68] sm:$0xf] %v181
    %186 = vst [vmem:[#allocation2 + $0x70] sm:$0xf] %v180
    %187 = vst [vmem:[#allocation2 + $0x78] sm:$0xf] %v183
    %188 = vrot.lane.b32.xlu0 %v36, 95
    %v189 = vpop.permute.xlu0 %188
    %190 = vrot.lane.b32.xlu0 %v40, 95
    %v191 = vpop.permute.xlu0 %190
    %192 = vrot.lane.b32.xlu0 %v37, 95
    %v193 = vpop.permute.xlu0 %192
    %194 = vrot.lane.b32.xlu0 %v41, 95
    %v195 = vpop.permute.xlu0 %194
    %vm196 = vcmp.lt.s32.totalorder %v57, 95
    %v197 = vsel %vm196, %v193, %v195
    %v198 = vsel %vm196, %v191, %v193
    %v199 = vsel %vm196, %v189, %v191
    %v200 = vsel %vm196, %v195, %v189
    %v205 = vrot.slane %v199, 4
    %v206 = vrot.slane %v198, 4
    %v207 = vrot.slane %v197, 4
    %v208 = vrot.slane %v200, 4
    %213 = vst [vmem:[#allocation2 + $0x60] sm:$0xf0] %v205
    %214 = vst [vmem:[#allocation2 + $0x68] sm:$0xf0] %v206
    %215 = vst [vmem:[#allocation2 + $0x70] sm:$0xf0] %v207
    %216 = vst [vmem:[#allocation2 + $0x78] sm:$0xf0] %v208
    %217 = vrot.lane.b32.xlu0 %v36, 94
    %v218 = vpop.permute.xlu0 %217
    %219 = vrot.lane.b32.xlu0 %v40, 94
    %v220 = vpop.permute.xlu0 %219
    %221 = vrot.lane.b32.xlu0 %v37, 94
    %v222 = vpop.permute.xlu0 %221
    %223 = vrot.lane.b32.xlu0 %v41, 94
    %v224 = vpop.permute.xlu0 %223
    %vm225 = vcmp.lt.s32.totalorder %v57, 94
    %v226 = vsel %vm225, %v222, %v224
    %v227 = vsel %vm225, %v220, %v222
    %v228 = vsel %vm225, %v218, %v220
    %v229 = vsel %vm225, %v224, %v218
    %230 = vst [vmem:[#allocation2 + $0x80] sm:$0xf] %v228
    %231 = vst [vmem:[#allocation2 + $0x88] sm:$0xf] %v227
    %232 = vst [vmem:[#allocation2 + $0x90] sm:$0xf] %v226
    %233 = vst [vmem:[#allocation2 + $0x98] sm:$0xf] %v229
    %v234 = vlaneseq
    %vm235 = vcmp.ge.s32.totalorder %v234, 0
    %vm236 = vcmp.lt.s32.totalorder %v234, 512
    %vm237 = vmand %vm235, %vm236
    %s238 = scalar_lea.vmem [#allocation2], 132
    %239 = vst.msk [vmem:[%s238] ss:$8 sm:$0xf] %vm237, 1.0
    %240 = vst.msk [vmem:[%s238] ss:$8 sm:$0x0] %vm237, 1.0
    %v241 = vld [vmem:[#allocation6] sm:$0xff]
    %v242 = vld [vmem:[#allocation2] sm:$0xff]
    %v243 = vld [vmem:[#allocation2 + $0x8] sm:$0xff]
    %v244 = vld [vmem:[#allocation2 + $0x10] sm:$0xff]
    %v245 = vld [vmem:[#allocation2 + $0x18] sm:$0xff]
    %v246 = vld [vmem:[#allocation2 + $0x20] sm:$0xff]
    %v247 = vld [vmem:[#allocation2 + $0x28] sm:$0xff]
    %v248 = vld [vmem:[#allocation2 + $0x30] sm:$0xff]
    %v249 = vld [vmem:[#allocation2 + $0x38] sm:$0xff]
    %v250 = vld [vmem:[#allocation2 + $0x40] sm:$0xff]
    %v251 = vld [vmem:[#allocation2 + $0x48] sm:$0xff]
    %v252 = vld [vmem:[#allocation2 + $0x50] sm:$0xff]
    %v253 = vld [vmem:[#allocation2 + $0x58] sm:$0xff]
    %v254 = vld [vmem:[#allocation2 + $0x60] sm:$0xff]
    %v255 = vld [vmem:[#allocation2 + $0x68] sm:$0xff]
    %v256 = vld [vmem:[#allocation2 + $0x70] sm:$0xff]
    %v257 = vld [vmem:[#allocation2 + $0x78] sm:$0xff]
    %v258 = vld [vmem:[#allocation2 + $0x80] sm:$0x1f]
    %v259 = vld [vmem:[#allocation2 + $0x88] sm:$0x1f]
    %v260 = vld [vmem:[#allocation2 + $0x90] sm:$0x1f]
    %v261 = vld [vmem:[#allocation2 + $0x98] sm:$0x1f]
    %vm262 = vcmask 302080
    %v264 = vsel %vm262, %v241, 0
    %vm266 = vcmask 1044480
    %v268 = vsel %vm266, %v258, 0
    %v271 = vsel %vm266, %v259, 0
    %v274 = vsel %vm266, %v260, 0
    %v277 = vsel %vm266, %v261, 0
    %279 = vmatprep.subr.mxu0 0.0
    %280 = vmatpush1.msra.mxu0 0.0
    %281 = vmatprep.subr.mxu0 0.0
    %282 = vmatpush1.msra.mxu0 0.0
    %283 = vmatprep.subr.mxu0 0.0
    %284 = vmatpush1.msra.mxu0 0.0
    %285 = vmatprep.subr.mxu0 0.0
    %286 = vmatpush1.msra.mxu0 0.0
    %287 = vmatprep.subr.mxu0 0.0
    %288 = vmatpush1.msra.mxu0 0.0
    %289 = vmatprep.subr.mxu0 0.0
    %290 = vmatpush1.msra.mxu0 0.0
    %291 = vmatprep.subr.mxu0 0.0
    %292 = vmatpush1.msra.mxu0 0.0
    %293 = vmatprep.subr.mxu0 0.0
    %294 = vmatpush1.msra.mxu0 0.0
    %295 = vmatprep.subr.mxu0 0.0
    %296 = vmatpush1.msra.mxu0 0.0
    %297 = vmatprep.subr.mxu0 0.0
    %298 = vmatpush1.msra.mxu0 0.0
    %299 = vmatprep.subr.mxu0 0.0
    %300 = vmatpush1.msra.mxu0 0.0
    %301 = vmatprep.subr.mxu0 %v271
    %302 = vmatpush1.msra.mxu0 %v268
    %303 = vmatprep.subr.mxu0 %v255
    %304 = vmatpush1.msra.mxu0 %v254
    %305 = vmatprep.subr.mxu0 %v251
    %306 = vmatpush1.msra.mxu0 %v250
    %307 = vmatprep.subr.mxu0 %v247
    %308 = vmatpush1.msra.mxu0 %v246
    %309 = vmatprep.subr.mxu0 %v243
    %310 = vmatpush1.msra.mxu0 %v242
    %311 = vmatprep.subr.mxu0 0.0
    %312 = vmatpush2.msra.mxu0 0.0
    %313 = vmatprep.subr.mxu0 0.0
    %314 = vmatpush2.msra.mxu0 0.0
    %315 = vmatprep.subr.mxu0 0.0
    %316 = vmatpush2.msra.mxu0 0.0
    %317 = vmatprep.subr.mxu0 0.0
    %318 = vmatpush2.msra.mxu0 0.0
    %319 = vmatprep.subr.mxu0 0.0
    %320 = vmatpush2.msra.mxu0 0.0
    %321 = vmatprep.subr.mxu0 0.0
    %322 = vmatpush2.msra.mxu0 0.0
    %323 = vmatprep.subr.mxu0 0.0
    %324 = vmatpush2.msra.mxu0 0.0
    %325 = vmatprep.subr.mxu0 0.0
    %326 = vmatpush2.msra.mxu0 0.0
    %327 = vmatprep.subr.mxu0 0.0
    %328 = vmatpush2.msra.mxu0 0.0
    %329 = vmatprep.subr.mxu0 0.0
    %330 = vmatpush2.msra.mxu0 0.0
    %331 = vmatprep.subr.mxu0 0.0
    %332 = vmatpush2.msra.mxu0 0.0
    %333 = vmatprep.subr.mxu0 0.0
    %334 = vmatpush2.msra.mxu0 0.0
    %335 = vmatprep.subr.mxu0 0.0
    %336 = vmatpush2.msra.mxu0 0.0
    %337 = vmatprep.subr.mxu0 0.0
    %338 = vmatpush2.msra.mxu0 0.0
    %339 = vmatprep.subr.mxu0 0.0
    %340 = vmatpush2.msra.mxu0 0.0
    %341 = vmatprep.subr.mxu0 0.0
    %342 = vmatpush2.msra.mxu0 0.0
    %343 = vmatprep.mubr.f32.mxu0 0.0
    %344 = vmatmul.mubr.f32.gmra.mxu0 %v264
    %v345 = vpop.f32.mrf.mxu0
    %v346 = vadd.f32 0.0, %v345
    %v347 = vpop.f32.mrf.mxu0
    %v348 = vadd.f32 0.0, %v347
    %349 = vdwg.mxu0
    %350 = vmatprep.subr.mxu0 0.0
    %351 = vmatpush1.msra.mxu0 0.0
    %352 = vmatprep.subr.mxu0 0.0
    %353 = vmatpush1.msra.mxu0 0.0
    %354 = vmatprep.subr.mxu0 0.0
    %355 = vmatpush1.msra.mxu0 0.0
    %356 = vmatprep.subr.mxu0 0.0
    %357 = vmatpush1.msra.mxu0 0.0
    %358 = vmatprep.subr.mxu0 0.0
    %359 = vmatpush1.msra.mxu0 0.0
    %360 = vmatprep.subr.mxu0 0.0
    %361 = vmatpush1.msra.mxu0 0.0
    %362 = vmatprep.subr.mxu0 0.0
    %363 = vmatpush1.msra.mxu0 0.0
    %364 = vmatprep.subr.mxu0 0.0
    %365 = vmatpush1.msra.mxu0 0.0
    %366 = vmatprep.subr.mxu0 0.0
    %367 = vmatpush1.msra.mxu0 0.0
    %368 = vmatprep.subr.mxu0 0.0
    %369 = vmatpush1.msra.mxu0 0.0
    %370 = vmatprep.subr.mxu0 0.0
    %371 = vmatpush1.msra.mxu0 0.0
    %372 = vmatprep.subr.mxu0 %v277
    %373 = vmatpush1.msra.mxu0 %v274
    %374 = vmatprep.subr.mxu0 %v257
    %375 = vmatpush1.msra.mxu0 %v256
    %376 = vmatprep.subr.mxu0 %v253
    %377 = vmatpush1.msra.mxu0 %v252
    %378 = vmatprep.subr.mxu0 %v249
    %379 = vmatpush1.msra.mxu0 %v248
    %380 = vmatprep.subr.mxu0 %v245
    %381 = vmatpush1.msra.mxu0 %v244
    %382 = vmatprep.subr.mxu0 0.0
    %383 = vmatpush2.msra.mxu0 0.0
    %384 = vmatprep.subr.mxu0 0.0
    %385 = vmatpush2.msra.mxu0 0.0
    %386 = vmatprep.subr.mxu0 0.0
    %387 = vmatpush2.msra.mxu0 0.0
    %388 = vmatprep.subr.mxu0 0.0
    %389 = vmatpush2.msra.mxu0 0.0
    %390 = vmatprep.subr.mxu0 0.0
    %391 = vmatpush2.msra.mxu0 0.0
    %392 = vmatprep.subr.mxu0 0.0
    %393 = vmatpush2.msra.mxu0 0.0
    %394 = vmatprep.subr.mxu0 0.0
    %395 = vmatpush2.msra.mxu0 0.0
    %396 = vmatprep.subr.mxu0 0.0
    %397 = vmatpush2.msra.mxu0 0.0
    %398 = vmatprep.subr.mxu0 0.0
    %399 = vmatpush2.msra.mxu0 0.0
    %400 = vmatprep.subr.mxu0 0.0
    %401 = vmatpush2.msra.mxu0 0.0
    %402 = vmatprep.subr.mxu0 0.0
    %403 = vmatpush2.msra.mxu0 0.0
    %404 = vmatprep.subr.mxu0 0.0
    %405 = vmatpush2.msra.mxu0 0.0
    %406 = vmatprep.subr.mxu0 0.0
    %407 = vmatpush2.msra.mxu0 0.0
    %408 = vmatprep.subr.mxu0 0.0
    %409 = vmatpush2.msra.mxu0 0.0
    %410 = vmatprep.subr.mxu0 0.0
    %411 = vmatpush2.msra.mxu0 0.0
    %412 = vmatprep.subr.mxu0 0.0
    %413 = vmatpush2.msra.mxu0 0.0
    %414 = vmatprep.mubr.f32.mxu0 0.0
    %415 = vmatmul.mubr.f32.gmra.mxu0 %v264
    %v416 = vpop.f32.mrf.mxu0
    %v417 = vadd.f32 0.0, %v416
    %v418 = vpop.f32.mrf.mxu0
    %v419 = vadd.f32 0.0, %v418
    %420 = vdwg.mxu0
    %421 = vst [vmem:[#allocation8] sm:$0xff] %v346
    %422 = vst [vmem:[#allocation8 + $0x8] sm:$0xff] %v348
    %423 = vst [vmem:[#allocation8 + $0x10] sm:$0xff] %v417
    %424 = vst [vmem:[#allocation8 + $0x18] sm:$0xff] %v419
    // Predicated region
    $region18: #{tpu_custom_call.1} parent=1 // pred_check
      _
    $region19: #{tpu_custom_call.1} parent=1 // pred_check_branch
      %426 = sbr.rel (0) target = $region21
    $region20: #{tpu_custom_call.1} parent=1 // pred_region
      %s428 = ssub.s32 512, 512
      %429 = vsyncadd [#allocation5], %s428
      %s431 = sshll.u32 [#allocation8], 4
      %s432 = int_to_ptr.vmem [resolvable:$true] %s431
      %434 = dma.vmem_to_hbm [thread:$0]  %s432, 512, %s2, [#allocation5]
    $region21: #{tpu_custom_call.1} parent=1 // pred_fallthru
      _
    // Predicated region
    $region22: #{tpu_custom_call.1} parent=1 // pred_check
      _
    $region23: #{tpu_custom_call.1} parent=1 // pred_check_branch
      %436 = sbr.rel (0) target = $region25
    $region24: #{tpu_custom_call.1} parent=1 // pred_region
      %437 = dma.done [#allocation5], 512
    $region25: #{tpu_custom_call.1} parent=1 // pred_fallthru
      _
    %438 = vsyncpa [#allocation4], 1
    %439 = vsyncpa [#allocation7], 1
    %440 = vsyncpa [#allocation5], 1

</llo_original>
